<compile_context>
chip_gen: v6e
topology: v6e:2x2x1
jax: 0.10.0
libtpu: 0.0.40
codegen_flags: <defaults>
</compile_context>

<pallas_src>
import functools

import jax
import jax.numpy as jnp
from jax import lax
from jax.experimental import pallas as pl
from jax.experimental.pallas import tpu as pltpu


# ----------------------------------------------------------------------------
# kernels
# ----------------------------------------------------------------------------
def _is_first_step():
    return jnp.logical_and(pl.program_id(0) == 0, pl.program_id(1) == 0)


def _sum_reduce_kernel(x_ref, sum_ref, *, w_total, tile_w, mask_w):
    """Accumulate per-feature sum over (batch, width) into a (1, D, 1) output."""
    @pl.when(_is_first_step())
    def _init():
        sum_ref[...] = jnp.zeros_like(sum_ref)

    x = x_ref[...].astype(jnp.float32)                       # (1, D, TILE_W)
    if mask_w:
        col = (pl.program_id(1) * tile_w
               + lax.broadcasted_iota(jnp.int32, x.shape, 2))
        x = jnp.where(col < w_total, x, 0.0)
    sum_ref[...] += jnp.sum(x, axis=2, keepdims=True)        # (1, D, 1)


def _sq_diff_reduce_kernel(x_ref, a_old_ref, a_new_ref, out_ref,
                           *, w_total, tile_w, mask_w):
    """Accumulate sum((x - old_ave) * (x - new_ave)) per feature -> (1, D, 1)."""
    @pl.when(_is_first_step())
    def _init():
        out_ref[...] = jnp.zeros_like(out_ref)

    x = x_ref[...].astype(jnp.float32)                       # (1, D, TILE_W)
    a_old = a_old_ref[...]                                   # (1, D, 1)
    a_new = a_new_ref[...]                                   # (1, D, 1)
    contrib = (x - a_old) * (x - a_new)                      # (1, D, TILE_W)
    if mask_w:
        col = (pl.program_id(1) * tile_w
               + lax.broadcasted_iota(jnp.int32, contrib.shape, 2))
        contrib = jnp.where(col < w_total, contrib, 0.0)
    out_ref[...] += jnp.sum(contrib, axis=2, keepdims=True)  # (1, D, 1)


def _center_scale_kernel(x_ref, a_ref, s_ref, o_ref):
    """o = (x - new_ave) * inv_std   (scale=True path)."""
    x = x_ref[...].astype(jnp.float32)
    o_ref[...] = ((x - a_ref[...]) * s_ref[...]).astype(o_ref.dtype)


def _center_kernel(x_ref, a_ref, o_ref):
    """o = x - new_ave               (scale=False path)."""
    x = x_ref[...].astype(jnp.float32)
    o_ref[...] = (x - a_ref[...]).astype(o_ref.dtype)


# ----------------------------------------------------------------------------
# wrapper
# ----------------------------------------------------------------------------
def _choose_tile_w(w, d):
    """Width tile: full W for small inputs, otherwise a 128-multiple that keeps
    each (1, D, TILE_W) f32 buffer around ~1 MiB (double-buffered by Pallas)."""
    if w <= 1024:
        return w
    budget = (1 << 20) // (4 * max(d, 1))
    return max(128, min(1024, (budget // 128) * 128))


def _vec_spec():
    # (1, D, 1) per-feature vector, VMEM-resident across the whole grid.
    return pl.BlockSpec((1, None, 1), lambda b, j: (0, 0, 0))


def global_normalization1_forward(inputs, running_ave, total_frames_seen,
                                  running_sq_diff=None, *, scale=False,
                                  training=True):
    """Pallas equivalent of GlobalNormalization1.forward.

    inputs:            (B, feature_dim, W) float32  (channel-first, like NCW)
    running_ave:       (1, feature_dim, 1) float32
    total_frames_seen: scalar float32
    running_sq_diff:   (1, feature_dim, 1) float32 (only if scale=True)

    Returns (normalized, new_running_ave, new_total_frames_seen,
             new_running_sq_diff_or_None).  Buffer mutation in the PyTorch
    module becomes functional state returned to the caller.
    """
    if not training:
        # eval mode is identity on the inputs, buffers unchanged
        return inputs, running_ave, total_frames_seen, running_sq_diff

    B, D, W = inputs.shape
    frames_in_input = float(B * W)

    tile_w = _choose_tile_w(W, D)
    n_w_tiles = pl.cdiv(W, tile_w)
    grid = (B, n_w_tiles)
    mask_w = (W % tile_w) != 0

    x_spec = pl.BlockSpec((1, D, tile_w), lambda b, j: (b, 0, j))
    vec_spec = pl.BlockSpec((1, D, 1), lambda b, j: (0, 0, 0))
    vec_shape = jax.ShapeDtypeStruct((1, D, 1), jnp.float32)
    reduce_params = pltpu.CompilerParams(
        dimension_semantics=("arbitrary", "arbitrary"))
    parallel_params = pltpu.CompilerParams(
        dimension_semantics=("parallel", "parallel"))

    # ---- pass 1: per-feature sum over (batch, width) ------------------------
    sum_kernel = functools.partial(_sum_reduce_kernel, w_total=W,
                                   tile_w=tile_w, mask_w=mask_w)
    sum_x = pl.pallas_call(
        sum_kernel,
        grid=grid,
        in_specs=[x_spec],
        out_specs=vec_spec,
        out_shape=vec_shape,
        compiler_params=reduce_params,
    )(inputs)

    new_total = total_frames_seen + frames_in_input
    new_ave = (running_ave * total_frames_seen + sum_x) / new_total

    if scale:
        # ---- pass 2: exact reference formula sum((x-a_old)*(x-a_new)) ------
        sq_kernel = functools.partial(_sq_diff_reduce_kernel, w_total=W,
                                      tile_w=tile_w, mask_w=mask_w)
        sq_inc = pl.pallas_call(
            sq_kernel,
            grid=grid,
            in_specs=[x_spec, vec_spec, vec_spec],
            out_specs=vec_spec,
            out_shape=vec_shape,
            compiler_params=reduce_params,
        )(inputs, running_ave, new_ave)

        new_sq_diff = running_sq_diff + sq_inc
        std = jnp.sqrt(new_sq_diff / new_total)        # tiny (1, D, 1) vector
        inv_std = 1.0 / std                            # mul-by-recip in kernel

        # ---- pass 3: normalize, megacore-parallel elementwise stream --------
        out = pl.pallas_call(
            _center_scale_kernel,
            grid=grid,
            in_specs=[x_spec, vec_spec, vec_spec],
            out_specs=x_spec,
            out_shape=jax.ShapeDtypeStruct((B, D, W), inputs.dtype),
            compiler_params=parallel_params,
        )(inputs, new_ave, inv_std)
        return out, new_ave, new_total, new_sq_diff

    # ---- scale=False: just center ------------------------------------------
    out = pl.pallas_call(
        _center_kernel,
        grid=grid,
        in_specs=[x_spec, vec_spec],
        out_specs=x_spec,
        out_shape=jax.ShapeDtypeStruct((B, D, W), inputs.dtype),
        compiler_params=parallel_params,
    )(inputs, new_ave)
    return out, new_ave, new_total, None


# ----------------------------------------------------------------------------
# demo / self-check
# ----------------------------------------------------------------------------
if __name__ == "__main__":
    key = jax.random.PRNGKey(0)
    bs, feature_dim, w = 2, 32, 16

    x = (jax.random.normal(key, (bs, feature_dim, w), dtype=jnp.float32)
         * 2.0 + 0.5)
    running_ave = jnp.zeros((1, feature_dim, 1), jnp.float32)
    running_sq_diff = jnp.zeros((1, feature_dim, 1), jnp.float32)
    total_frames_seen = jnp.zeros((), jnp.float32)

    # scale=True training-mode forward
    out, new_ave, new_total, new_sq = global_normalization1_forward(
        x, running_ave, total_frames_seen, running_sq_diff,
        scale=True, training=True)
    jax.block_until_ready((out, new_ave, new_total, new_sq))

    # pure-JAX reference of the PyTorch forward
    frames = bs * w
    ref_ave = ((running_ave * total_frames_seen
                + x.sum(axis=(0, 2), keepdims=True))
               / (total_frames_seen + frames))
    ref_sq = running_sq_diff + ((x - running_ave) * (x - ref_ave)).sum(
        axis=(0, 2), keepdims=True)
    ref_total = total_frames_seen + frames
    ref_std = jnp.sqrt(ref_sq / ref_total)
    ref_out = (x - ref_ave) / ref_std

    assert out.shape == x.shape
    assert jnp.allclose(new_ave, ref_ave, rtol=1e-5, atol=1e-5)
    assert jnp.allclose(new_sq, ref_sq, rtol=1e-5, atol=1e-5)
    assert float(new_total) == float(ref_total)
    assert jnp.allclose(out, ref_out, rtol=1e-4, atol=1e-4)

    # scale=False path
    out2, new_ave2, new_total2, _ = global_normalization1_forward(
        x, running_ave, total_frames_seen, None, scale=False, training=True)
    jax.block_until_ready(out2)
    assert jnp.allclose(out2, x - ref_ave, rtol=1e-5, atol=1e-5)

    # eval mode is identity
    out3, _, _, _ = global_normalization1_forward(
        x, running_ave, total_frames_seen, running_sq_diff,
        scale=True, training=False)
    assert jnp.allclose(out3, x)

    print("KERNEL_OK")
</pallas_src>

<mosaic_0001>
module attributes {stable_mosaic.version = 11 : i64} {
  func.func @_sum_reduce_kernel(%arg0: i32, %arg1: i32, %arg2: memref<1x32x16xf32, #tpu.memory_space<vmem>>, %arg3: memref<1x32x1xf32, #tpu.memory_space<vmem>>) attributes {dimension_semantics = [#tpu.dimension_semantics<arbitrary>, #tpu.dimension_semantics<arbitrary>], iteration_bounds = array<i64: 2, 1>, scalar_prefetch = 0 : i64, scratch_operands = 0 : i64, tpu.core_type = #tpu.core_type<tc>, window_params = [{transform_indices = @transform_0, window_bounds = array<i64: 1, 32, 16>}, {pipeline_mode = #tpu.pipeline_mode<synchronous>, transform_indices = @transform_1, window_bounds = array<i64: 1, 32, 1>}]} {
    %c0_i32 = arith.constant 0 : i32
    %0 = arith.cmpi eq, %arg0, %c0_i32 : i32
    %c0_i32_0 = arith.constant 0 : i32
    %1 = arith.cmpi eq, %arg1, %c0_i32_0 : i32
    %2 = arith.andi %0, %1 : i1
    %3 = arith.extui %2 : i1 to i32
    %c0_i32_1 = arith.constant 0 : i32
    %4 = arith.cmpi ne, %3, %c0_i32_1 : i32
    scf.if %4 {
      %cst_10 = arith.constant 0.000000e+00 : f32
      %11 = vector.broadcast %cst_10 : f32 to vector<1x32x1xf32>
      %c0_11 = arith.constant 0 : index
      %c0_12 = arith.constant 0 : index
      %c0_13 = arith.constant 0 : index
      %12 = vector.load %arg3[%c0_11, %c0_12, %c0_13] : memref<1x32x1xf32, #tpu.memory_space<vmem>>, vector<1x32x1xf32>
      tpu.vector_store %arg3[%c0_11, %c0_12, %c0_13], %11 {strides = array<i32>} : memref<1x32x1xf32, #tpu.memory_space<vmem>>, vector<1x32x1xf32>,
    } else {
    }
    %c0 = arith.constant 0 : index
    %c0_2 = arith.constant 0 : index
    %c0_3 = arith.constant 0 : index
    %5 = vector.load %arg2[%c0, %c0_2, %c0_3] : memref<1x32x16xf32, #tpu.memory_space<vmem>>, vector<1x32x16xf32>
    %c0_4 = arith.constant 0 : index
    %c0_5 = arith.constant 0 : index
    %c0_6 = arith.constant 0 : index
    %6 = vector.load %arg3[%c0_4, %c0_5, %c0_6] : memref<1x32x1xf32, #tpu.memory_space<vmem>>, vector<1x32x1xf32>
    %cst = arith.constant dense<0.000000e+00> : vector<1x32xf32>
    %7 = vector.multi_reduction <add>, %5, %cst [2] : vector<1x32x16xf32> to vector<1x32xf32>
    %8 = vector.shape_cast %7 : vector<1x32xf32> to vector<1x32x1xf32>
    %9 = arith.addf %6, %8 : vector<1x32x1xf32>
    %c0_7 = arith.constant 0 : index
    %c0_8 = arith.constant 0 : index
    %c0_9 = arith.constant 0 : index
    %10 = vector.load %arg3[%c0_7, %c0_8, %c0_9] : memref<1x32x1xf32, #tpu.memory_space<vmem>>, vector<1x32x1xf32>
    tpu.vector_store %arg3[%c0_7, %c0_8, %c0_9], %9 {strides = array<i32>} : memref<1x32x1xf32, #tpu.memory_space<vmem>>, vector<1x32x1xf32>,
    return
  }
  func.func @transform_0(%arg0: i32, %arg1: i32) -> (i32, i32, i32) {
    %c0_i32 = arith.constant 0 : i32
    %c0_i32_0 = arith.constant 0 : i32
    return %arg0, %c0_i32, %arg1 : i32, i32, i32
  }
  func.func @transform_1(%arg0: i32, %arg1: i32) -> (i32, i32, i32) {
    %c0_i32 = arith.constant 0 : i32
    %c0_i32_0 = arith.constant 0 : i32
    %c0_i32_1 = arith.constant 0 : i32
    %c0_i32_2 = arith.constant 0 : i32
    return %c0_i32, %c0_i32_0, %c0_i32_1 : i32, i32, i32
  }
}

</mosaic_0001>

<llo_original>
// kernel: tpu_custom_call.1
$region0: #{tpu_custom_call.1}
  #allocation0 [shape = 'u32[]', space=smem, size = 0x4, offset = 0x4, fixed_abs, tag = 'smem constant byte address 0x4 - core index']
  #allocation1 [shape = 'u32[144,128]{1,0:T(1,128)}', space=vmem, size = 0x12000, scoped, tag = 'internal scratch']
  %s0 = inlined_call_operand.vmem [shape: f32[2,32,16], index: 0, kind: input, shape index: {}]
  %s1 = inlined_call_operand.vmem [shape: f32[1,32,1], index: 1, kind: output, shape index: {}]
  %s2 = sld [smem:[#allocation0]]
  $region41: #{tpu_custom_call.1} parent=0
    _
  %s4 = ssub.s32 1, %s2
  %s5 = scalar_select 0, %s4, %s2
  loop: start=0, step=1, limit=4
  $region2: #{tpu_custom_call.1} parent=0 // loop_pre_header
    _
  $region3: #{tpu_custom_call.1} parent=0 // loop_header
    %s7 = sphi 0, %s11
    %p8 = scmp.ge.s32.totalorder %s7, 4
    %s14 = sphi 0, %s26
    %s15 = sphi 0, %s22
    %s16 = sphi 0, %s14
    %s17 = sphi 0, %s15
    %s18 = sphi 0, %s16
    %s19 = sphi 0, %s17
    %s31 = sphi 0, %s33
    %s34 = sphi 0, %s31
    %s35 = sphi 0, %s34
    %s51 = sphi 0, %s35
    %s55 = sphi 0, %s55
    %s57 = sphi 0, %s55
    %s58 = sphi 0, %s57
    %s72 = sphi 0, %s58
  $region4: #{tpu_custom_call.1} parent=0 // loop_header_branch
    %10 = sbr.rel (%p8) target = $region8
  $region5: #{tpu_custom_call.1} parent=0 // loop_body
    %s12 = ssub.s32 %s7, 1
    %s13 = ssub.s32 %s7, 2
    %s20 = sadd.s32 1, %s15
    %p21 = scmp.ge.s32.totalorder %s20, 1
    %s22 = scalar_select %p21, 0, %s20
    %s23 = sadd.s32 1, %s14
    %s24 = scalar_select %p21, %s23, %s14
    %p25 = scmp.ge.s32.totalorder %s24, 2
    %s26 = scalar_select %p25, 0, %s24
    %s27 = ssub.s32 %s14, %s26
    %s28 = ssub.s32 %s15, %s22
    %s29 = sor.u32 %s27, %s28
    %p30 = scmp.eq.s32.totalorder %s29, 0
    %s32 = sadd.s32 %s31, 1
    %s33 = scalar_select %p30, %s31, %s32
    %p36 = pneg %p30
    %p37 = scmp.eq.s32.totalorder %s7, 1
    %p38 = por %p36, %p37
    %p39 = scmp.ne.s32.totalorder %s31, %s34
    %p40 = scmp.eq.s32.totalorder %s7, 0
    %p41 = por %p39, %p40
    %p42 = scmp.ne.s32.totalorder %s31, %s34
    %p43 = scmp.eq.s32.totalorder %s12, 1
    %p44 = por %p42, %p43
    %p45 = scmp.ne.s32.totalorder %s34, %s35
    %p46 = scmp.eq.s32.totalorder %s12, 0
    %p47 = por %p45, %p46
    %p48 = scmp.ne.s32.totalorder %s34, %s35
    %p49 = scmp.eq.s32.totalorder %s13, 1
    %p50 = por %p48, %p49
    %p52 = scmp.ne.s32.totalorder %s35, %s51
    %p53 = scmp.eq.s32.totalorder %s13, 0
    %p54 = por %p52, %p53
    %s56 = sadd.s32 %s55, 1
    %p59 = scmp.eq.s32.totalorder %s7, 1
    %p60 = scmp.ne.s32.totalorder %s55, %s57
    %p61 = scmp.eq.s32.totalorder %s7, 0
    %p62 = por %p60, %p61
    %p63 = scmp.ne.s32.totalorder %s55, %s57
    %p64 = scmp.eq.s32.totalorder %s12, 1
    %p65 = por %p63, %p64
    %p66 = scmp.ne.s32.totalorder %s57, %s58
    %p67 = scmp.eq.s32.totalorder %s12, 0
    %p68 = por %p66, %p67
    %p69 = scmp.ne.s32.totalorder %s57, %s58
    %p70 = scmp.eq.s32.totalorder %s13, 1
    %p71 = por %p69, %p70
    %p73 = scmp.ne.s32.totalorder %s58, %s72
    %p74 = scmp.eq.s32.totalorder %s13, 0
    %p75 = por %p73, %p74
    %p76 = scmp.le.s32.totalorder 1, %s7
    %p77 = scmp.lt.s32.totalorder %s7, 3
    %p78 = pnand %p76, %p77
    %p79 = pneg %p78
    // Predicated region
    $region9: #{tpu_custom_call.1} parent=5 // pred_check
      _
    $region10: #{tpu_custom_call.1} parent=5 // pred_check_branch
      %81 = sbr.rel (%p78) target = $region12
    $region11: #{tpu_custom_call.1} parent=5 // pred_region
      %s82 = ssub.s32 %s7, 1
    $region12: #{tpu_custom_call.1} parent=5 // pred_fallthru
      _
    %p83 = scmp.lt.s32.totalorder %s7, 2
    // Predicated region
    $region13: #{tpu_custom_call.1} parent=5 // pred_check
      %p84 = pneg %p83
    $region14: #{tpu_custom_call.1} parent=5 // pred_check_branch
      %86 = sbr.rel (%p84) target = $region16
    $region15: #{tpu_custom_call.1} parent=5 // pred_region
      // Predicated region
      $region17: #{tpu_custom_call.1} parent=15 // pred_check
        %p87 = pneg %p41
      $region18: #{tpu_custom_call.1} parent=15 // pred_check_branch
        %89 = sbr.rel (%p87) target = $region20
      $region19: #{tpu_custom_call.1} parent=15 // pred_region
        %p90 = scmp.lt.s32.totalorder %s14, 1
        %s91 = scalar_select %p90, %s14, 1
        %p92 = scmp.lt.s32.totalorder %s15, 0
        %s93 = scalar_select %p92, %s15, 0
        %s94 = smul.addr %s91, 4
        %s95 = sadd.s32 %s93, %s94
        %s96 = smul.addr %s95, 8
        %s97 = scalar_lea.vmem %s0, %s96
      $region20: #{tpu_custom_call.1} parent=15 // pred_fallthru
        _
    $region16: #{tpu_custom_call.1} parent=5 // pred_fallthru
      _
    %p98 = scmp.le.s32.totalorder 1, %s7
    %p99 = scmp.lt.s32.totalorder %s7, 3
    %p100 = pnand %p98, %p99
    %p101 = pneg %p100
    // Predicated region
    $region21: #{tpu_custom_call.1} parent=5 // pred_check
      _
    $region22: #{tpu_custom_call.1} parent=5 // pred_check_branch
      %103 = sbr.rel (%p100) target = $region24
    $region23: #{tpu_custom_call.1} parent=5 // pred_region
      %s104 = ssub.s32 %s7, 1
      %p105 = scmp.lt.s32.totalorder %s16, 1
      %s106 = scalar_select %p105, %s16, 1
      %p107 = scmp.lt.s32.totalorder %s17, 0
      %s108 = scalar_select %p107, %s17, 0
      %s109 = smul.addr %s106, 4
      %s110 = sadd.s32 %s108, %s109
      %s111 = smul.addr %s110, 8
      %s112 = scalar_lea.vmem %s0, %s111
      %p113 = pneg %p47
      %p114 = pneg %p44
      %p115 = pneg %p68
      %p116 = pneg %p65
      %p117 = scmp.lt.s32.totalorder %s16, 1
      %s118 = scalar_select %p117, %s16, 1
      %p119 = scmp.lt.s32.totalorder %s17, 0
      %s120 = scalar_select %p119, %s17, 0
      %s121 = smul.addr %s118, 4
      %s122 = sadd.s32 %s120, %s121
      %s123 = smul.addr %s122, 8
      %s124 = scalar_lea.vmem %s0, %s123
      %p125 = scmp.eq.s32.totalorder %s16, 0
      %p126 = scmp.eq.s32.totalorder %s17, 0
      %p127 = pnand %p125, %p126
      %p128 = pneg %p127
      // Predicated region
      $region25: #{tpu_custom_call.1} parent=23 // pred_check
        _
      $region26: #{tpu_custom_call.1} parent=23 // pred_check_branch
        %130 = sbr.rel (%p127) target = $region28
      $region27: #{tpu_custom_call.1} parent=23 // pred_region
        %vm131 = vcmask 7168
        %132 = vst.msk [vmem:[%s1] sm:$0xff] %vm131, 0.0
        %133 = vst.msk [vmem:[%s1 + $0x8] sm:$0xff] %vm131, 0.0
        %134 = vst.msk [vmem:[%s1 + $0x10] sm:$0xff] %vm131, 0.0
        %135 = vst.msk [vmem:[%s1 + $0x18] sm:$0xff] %vm131, 0.0
      $region28: #{tpu_custom_call.1} parent=23 // pred_fallthru
        _
      %v136 = vld [vmem:[%s124] sm:$0xff]
      %v137 = vld [vmem:[%s124 + $0x8] sm:$0xff]
      %v138 = vld [vmem:[%s124 + $0x10] sm:$0xff]
      %v139 = vld [vmem:[%s124 + $0x18] sm:$0xff]
      %v140 = vld [vmem:[%s1] sm:$0xff]
      %v141 = vld [vmem:[%s1 + $0x8] sm:$0xff]
      %v142 = vld [vmem:[%s1 + $0x10] sm:$0xff]
      %v143 = vld [vmem:[%s1 + $0x18] sm:$0xff]
      %vm144 = vcmask 130048
      %v145 = vsel %vm144, %v136, 0.0
      %146 = vadd.xlane.f32.xlu0 %v145
      %v147 = vpop.xlane.xlu0 %146
      %v148 = vsel %vm144, %v137, 0.0
      %149 = vadd.xlane.f32.xlu0 %v148
      %v150 = vpop.xlane.xlu0 %149
      %v151 = vsel %vm144, %v138, 0.0
      %152 = vadd.xlane.f32.xlu0 %v151
      %v153 = vpop.xlane.xlu0 %152
      %v154 = vsel %vm144, %v139, 0.0
      %155 = vadd.xlane.f32.xlu0 %v154
      %v156 = vpop.xlane.xlu0 %155
      %v157 = vadd.f32 %v140, %v147
      %v158 = vadd.f32 %v141, %v150
      %v159 = vadd.f32 %v142, %v153
      %v160 = vadd.f32 %v143, %v156
      %vm161 = vcmask 7168
      %162 = vst.msk [vmem:[%s1] sm:$0xff] %vm161, %v157
      %163 = vst.msk [vmem:[%s1 + $0x8] sm:$0xff] %vm161, %v158
      %164 = vst.msk [vmem:[%s1 + $0x10] sm:$0xff] %vm161, %v159
      %165 = vst.msk [vmem:[%s1 + $0x18] sm:$0xff] %vm161, %v160
      // Predicated region
      $region29: #{tpu_custom_call.1} parent=23 // pred_check
        %p166 = pneg %p65
      $region30: #{tpu_custom_call.1} parent=23 // pred_check_branch
        %168 = sbr.rel (%p166) target = $region32
      $region31: #{tpu_custom_call.1} parent=23 // pred_region
        _
      $region32: #{tpu_custom_call.1} parent=23 // pred_fallthru
        _
      // Predicated region
      $region33: #{tpu_custom_call.1} parent=23 // pred_check
        %p169 = pneg %p65
      $region34: #{tpu_custom_call.1} parent=23 // pred_check_branch
        %171 = sbr.rel (%p169) target = $region36
      $region35: #{tpu_custom_call.1} parent=23 // pred_region
        _
      $region36: #{tpu_custom_call.1} parent=23 // pred_fallthru
        _
    $region24: #{tpu_custom_call.1} parent=5 // pred_fallthru
      _
    %p172 = scmp.le.s32.totalorder 2, %s7
    // Predicated region
    $region37: #{tpu_custom_call.1} parent=5 // pred_check
      %p173 = pneg %p172
    $region38: #{tpu_custom_call.1} parent=5 // pred_check_branch
      %175 = sbr.rel (%p173) target = $region40
    $region39: #{tpu_custom_call.1} parent=5 // pred_region
      %s176 = ssub.s32 %s7, 2
    $region40: #{tpu_custom_call.1} parent=5 // pred_fallthru
      _
  $region6: #{tpu_custom_call.1} parent=0 // loop_footer
    %s11 = sadd.s32 1, %s7
  $region7: #{tpu_custom_call.1} parent=0 // loop_footer_branch
    %6 = sbr.rel target = $region3
  $region8: #{tpu_custom_call.1} parent=0 // loop_exit
    _

</llo_original>
